<compile_context>
chip_gen: v7x
topology: tpu7x:2x2x1
jax: 0.10.0
libtpu: 0.0.40
codegen_flags: <defaults>
</compile_context>

<pallas_src>
import functools

import numpy as np
import jax
import jax.numpy as jnp
from jax.experimental import pallas as pl
from jax.experimental.pallas import tpu as pltpu


def _postnet_kernel(x_ref, wT_ref, b_ref, normed_ref, *, method, eps):
    # x_ref:      (1, C, m)  input feature slab (one batch element)
    # wT_ref:     (C, 2)     1x1-conv weight, transposed (col 0 -> real, col 1 -> imag)
    # b_ref:      (2,)       bias, in SMEM
    # normed_ref: (1, 2, m)  normalized stft (cos,sin) or div-normalized
    x = x_ref[0].astype(jnp.float32)            # (C, m)
    wT = wT_ref[...].astype(jnp.float32)        # (C, 2)

    # 1x1 conv == channel contraction; broadcast-multiply + sublane reduce on
    # the VPU/XLU keeps full f32 accuracy (mem-bound kernel, compute is free).
    real = jnp.sum(x * wT[:, 0:1], axis=0, keepdims=True) + b_ref[0]   # (1, m)
    imag = jnp.sum(x * wT[:, 1:2], axis=0, keepdims=True) + b_ref[1]   # (1, m)

    mag_sq = real * real + imag * imag
    if method == "atan2":
        # cos(atan2(i, r)) = r / |z|,  sin(atan2(i, r)) = i / |z|
        inv = jnp.where(mag_sq > 0.0, 1.0 / jnp.sqrt(mag_sq), 0.0)
        cos_v = jnp.where(mag_sq > 0.0, real * inv, 1.0)   # atan2(0,0)=0 -> cos=1
        sin_v = imag * inv                                  #               sin=0
        out = jnp.concatenate([cos_v, sin_v], axis=0)       # (2, m)
    elif method == "div":
        inv = 1.0 / (jnp.sqrt(mag_sq) + eps)
        out = jnp.concatenate([real * inv, imag * inv], axis=0)
    else:
        raise NotImplementedError(f"stft_norm_method={method!r}")

    normed_ref[0] = out.astype(normed_ref.dtype)


def _pick_m_tile(M, C, itemsize, target_bytes=2 * 1024 * 1024):
    """Lane-dense (multiple-of-128) tile along flattened F*T so the (C, m_tile)
    input slab is ~target_bytes; small arrays use one full-extent tile (legal
    for any size).  Non-divisible large M uses a ragged last block."""
    cap = max(128, (target_bytes // max(1, C * itemsize)) // 128 * 128)
    if M <= cap:
        return M
    return cap


def stream_phase_postnet_forward(x, weight, bias, *, method="atan2", eps=1e-5):
    """x: [N, C, F, T]; weight: [2, C] (1x1 conv kernel, squeezed); bias: [2].

    Returns (normed_stft [N,2,F,T], out_angle [N,F,T]).
    """
    N, C, F, T = x.shape
    M = F * T
    x3 = x.reshape(N, C, M)                                   # metadata-only
    wT = jnp.asarray(weight, jnp.float32).reshape(2, C).T     # (C, 2)
    b = jnp.asarray(bias, jnp.float32).reshape(2)

    itemsize = x.dtype.itemsize
    m_tile = _pick_m_tile(M, C, itemsize)
    grid = (N, pl.cdiv(M, m_tile))

    kernel = functools.partial(_postnet_kernel, method=method, eps=float(eps))

    out_bytes = N * 2 * M * itemsize
    cost = pl.CostEstimate(
        flops=int(N * M * (4 * C + 10)),
        transcendentals=int(N * M),
        bytes_accessed=int(N * C * M * itemsize + out_bytes + wT.size * 4 + b.size * 4),
    )

    normed3 = pl.pallas_call(
        kernel,
        out_shape=jax.ShapeDtypeStruct((N, 2, M), x.dtype),
        grid=grid,
        in_specs=[
            pl.BlockSpec((1, C, m_tile), lambda n, j: (n, 0, j)),
            pl.BlockSpec((C, 2), lambda n, j: (0, 0)),
            pl.BlockSpec(memory_space=pltpu.MemorySpace.SMEM),
        ],
        out_specs=pl.BlockSpec((1, 2, m_tile), lambda n, j: (n, 0, j)),
        compiler_params=pltpu.CompilerParams(
            dimension_semantics=("parallel", "parallel")),
        cost_estimate=cost,
    )(x3, wT, b)

    normed = normed3.reshape(N, 2, F, T)
    # atan2 is invariant under positive scaling, so the angle is recovered
    # exactly from the normalized (cos-like, sin-like) pair; no second copy of
    # the raw conv output needs to be written to HBM.
    # TODO(synk): angle uses jnp.arctan2 outside the kernel — lax.atan2 has no
    # guaranteed Mosaic lowering; all heavy per-pixel work stays in Pallas.
    angle = jnp.arctan2(normed[:, 1, :, :], normed[:, 0, :, :])
    return normed, angle


class StreamPhase_PostNet:
    """JAX/Pallas mirror of the PyTorch module (1x1 conv params held here)."""

    def __init__(self, channel_sP, key, stft_norm_method="atan2",
                 stft_div_norm_eps=1e-5):
        kw, kb = jax.random.split(key)
        bound = 1.0 / np.sqrt(channel_sP)          # nn.Conv2d default init, 1x1 kernel
        self.weight = jax.random.uniform(kw, (2, channel_sP), jnp.float32, -bound, bound)
        self.bias = jax.random.uniform(kb, (2,), jnp.float32, -bound, bound)
        self.method = stft_norm_method
        self.eps = stft_div_norm_eps

    def __call__(self, feature_sP):
        return stream_phase_postnet_forward(
            feature_sP, self.weight, self.bias, method=self.method, eps=self.eps)


if __name__ == "__main__":
    key = jax.random.PRNGKey(0)
    kx, kp = jax.random.split(key)

    # Small shapes consistent with PHASEN's phase stream: N=2, channel_sP=8, F=16, T=16.
    N, C, F, T = 2, 8, 16, 16
    x = jax.random.normal(kx, (N, C, F, T), dtype=jnp.float32)

    mod = StreamPhase_PostNet(C, kp)                  # default 'atan2' norm method
    normed, angle = mod(x)
    normed = jax.block_until_ready(normed)
    angle = jax.block_until_ready(angle)

    assert normed.shape == (N, 2, F, T), normed.shape
    assert angle.shape == (N, F, T), angle.shape
    assert normed.dtype == x.dtype

    # Pure-JAX reference (same math as the PyTorch module).
    conv_ref = jnp.einsum("ncft,oc->noft", x, mod.weight,
                          precision=jax.lax.Precision.HIGHEST)
    conv_ref = conv_ref + mod.bias[None, :, None, None]
    real_r, imag_r = conv_ref[:, 0:1], conv_ref[:, 1:2]
    angle_ref = jnp.arctan2(imag_r, real_r)
    normed_ref = jnp.concatenate([jnp.cos(angle_ref), jnp.sin(angle_ref)], axis=1)
    angle_ref = angle_ref[:, 0]

    np.testing.assert_allclose(np.asarray(normed), np.asarray(normed_ref),
                               rtol=1e-4, atol=1e-4)
    np.testing.assert_allclose(np.asarray(angle), np.asarray(angle_ref),
                               rtol=1e-4, atol=1e-4)

    # Also exercise the 'div' normalization branch of the module.
    mod_div = StreamPhase_PostNet(C, kp, stft_norm_method="div",
                                  stft_div_norm_eps=1e-5)
    normed_d, angle_d = mod_div(x)
    normed_d = jax.block_until_ready(normed_d)
    angle_d = jax.block_until_ready(angle_d)
    normed_d_ref = conv_ref / (jnp.sqrt(real_r ** 2 + imag_r ** 2) + 1e-5)
    np.testing.assert_allclose(np.asarray(normed_d), np.asarray(normed_d_ref),
                               rtol=1e-4, atol=1e-4)
    np.testing.assert_allclose(np.asarray(angle_d), np.asarray(angle_ref),
                               rtol=1e-4, atol=1e-4)

    print("KERNEL_OK")
</pallas_src>

<mosaic_0001>
module attributes {stable_mosaic.version = 11 : i64} {
  func.func @_postnet_kernel(%arg0: i32, %arg1: i32, %arg2: memref<1x8x256xf32, #tpu.memory_space<vmem>>, %arg3: memref<8x2xf32, #tpu.memory_space<vmem>>, %arg4: memref<2xf32, #tpu.memory_space<smem>>, %arg5: memref<1x2x256xf32, #tpu.memory_space<vmem>>) attributes {dimension_semantics = [#tpu.dimension_semantics<parallel>, #tpu.dimension_semantics<parallel>], iteration_bounds = array<i64: 2, 1>, scalar_prefetch = 0 : i64, scratch_operands = 0 : i64, tpu.core_type = #tpu.core_type<tc>, window_params = [{transform_indices = @transform_0, window_bounds = array<i64: 1, 8, 256>}, {pipeline_mode = #tpu.pipeline_mode<synchronous>, transform_indices = @transform_1, window_bounds = array<i64: 8, 2>}, {transform_indices = @transform_2, window_bounds = array<i64: 2>}, {transform_indices = @transform_3, window_bounds = array<i64: 1, 2, 256>}]} {
    %c0 = arith.constant 0 : index
    %c0_0 = arith.constant 0 : index
    %c0_1 = arith.constant 0 : index
    %0 = vector.load %arg2[%c0, %c0_0, %c0_1] : memref<1x8x256xf32, #tpu.memory_space<vmem>>, vector<1x8x256xf32>
    %1 = vector.shape_cast %0 : vector<1x8x256xf32> to vector<8x256xf32>
    %c0_2 = arith.constant 0 : index
    %c0_3 = arith.constant 0 : index
    %2 = vector.load %arg3[%c0_2, %c0_3] : memref<8x2xf32, #tpu.memory_space<vmem>>, vector<8x2xf32>
    %3 = vector.extract_strided_slice %2 {offsets = [0, 0], sizes = [8, 1], strides = [1, 1]} : vector<8x2xf32> to vector<8x1xf32>
    %4 = vector.broadcast %3 : vector<8x1xf32> to vector<8x256xf32>
    %5 = arith.mulf %1, %4 : vector<8x256xf32>
    %cst = arith.constant dense<0.000000e+00> : vector<256xf32>
    %6 = vector.multi_reduction <add>, %5, %cst [0] : vector<8x256xf32> to vector<256xf32>
    %7 = vector.shape_cast %6 : vector<256xf32> to vector<1x256xf32>
    %c0_4 = arith.constant 0 : index
    %8 = memref.load %arg4[%c0_4] : memref<2xf32, #tpu.memory_space<smem>>
    %9 = vector.broadcast %8 : f32 to vector<1x256xf32>
    %10 = arith.addf %7, %9 : vector<1x256xf32>
    %11 = vector.extract_strided_slice %2 {offsets = [0, 1], sizes = [8, 1], strides = [1, 1]} : vector<8x2xf32> to vector<8x1xf32>
    %12 = vector.broadcast %11 : vector<8x1xf32> to vector<8x256xf32>
    %13 = arith.mulf %1, %12 : vector<8x256xf32>
    %cst_5 = arith.constant dense<0.000000e+00> : vector<256xf32>
    %14 = vector.multi_reduction <add>, %13, %cst_5 [0] : vector<8x256xf32> to vector<256xf32>
    %15 = vector.shape_cast %14 : vector<256xf32> to vector<1x256xf32>
    %c1 = arith.constant 1 : index
    %16 = memref.load %arg4[%c1] : memref<2xf32, #tpu.memory_space<smem>>
    %17 = vector.broadcast %16 : f32 to vector<1x256xf32>
    %18 = arith.addf %15, %17 : vector<1x256xf32>
    %19 = arith.mulf %10, %10 : vector<1x256xf32>
    %20 = arith.mulf %18, %18 : vector<1x256xf32>
    %21 = arith.addf %19, %20 : vector<1x256xf32>
    %cst_6 = arith.constant 0.000000e+00 : f32
    %22 = vector.broadcast %cst_6 : f32 to vector<1x256xf32>
    %23 = arith.cmpf ogt, %21, %22 : vector<1x256xf32>
    %24 = math.sqrt %21 : vector<1x256xf32>
    %cst_7 = arith.constant 1.000000e+00 : f32
    %25 = vector.broadcast %cst_7 : f32 to vector<1x256xf32>
    %26 = arith.divf %25, %24 : vector<1x256xf32>
    %cst_8 = arith.constant 0.000000e+00 : f32
    %27 = vector.broadcast %cst_8 : f32 to vector<1x256xf32>
    %28 = arith.select %23, %26, %27 : vector<1x256xi1>, vector<1x256xf32>
    %cst_9 = arith.constant 0.000000e+00 : f32
    %29 = vector.broadcast %cst_9 : f32 to vector<1x256xf32>
    %30 = arith.cmpf ogt, %21, %29 : vector<1x256xf32>
    %31 = arith.mulf %10, %28 : vector<1x256xf32>
    %cst_10 = arith.constant 1.000000e+00 : f32
    %32 = vector.broadcast %cst_10 : f32 to vector<1x256xf32>
    %33 = arith.select %30, %31, %32 : vector<1x256xi1>, vector<1x256xf32>
    %34 = arith.mulf %18, %28 : vector<1x256xf32>
    %35 = tpu.concatenate %33, %34 in 0 : vector<1x256xf32>, vector<1x256xf32> -> vector<2x256xf32>
    %c0_11 = arith.constant 0 : index
    %c0_12 = arith.constant 0 : index
    %c0_13 = arith.constant 0 : index
    %36 = vector.load %arg5[%c0_11, %c0_12, %c0_13] : memref<1x2x256xf32, #tpu.memory_space<vmem>>, vector<1x2x256xf32>
    %37 = vector.shape_cast %36 : vector<1x2x256xf32> to vector<2x256xf32>
    %38 = vector.shape_cast %35 : vector<2x256xf32> to vector<1x2x256xf32>
    tpu.vector_store %arg5[%c0_11, %c0_12, %c0_13], %38 {strides = array<i32>} : memref<1x2x256xf32, #tpu.memory_space<vmem>>, vector<1x2x256xf32>,
    return
  }
  func.func @transform_0(%arg0: i32, %arg1: i32) -> (i32, i32, i32) {
    %c0_i32 = arith.constant 0 : i32
    %c0_i32_0 = arith.constant 0 : i32
    return %arg0, %c0_i32, %arg1 : i32, i32, i32
  }
  func.func @transform_1(%arg0: i32, %arg1: i32) -> (i32, i32) {
    %c0_i32 = arith.constant 0 : i32
    %c0_i32_0 = arith.constant 0 : i32
    %c0_i32_1 = arith.constant 0 : i32
    return %c0_i32, %c0_i32_0 : i32, i32
  }
  func.func @transform_2(%arg0: i32, %arg1: i32) -> i32 {
    %c0_i32 = arith.constant 0 : i32
    %c0_i32_0 = arith.constant 0 : i32
    return %c0_i32 : i32
  }
  func.func @transform_3(%arg0: i32, %arg1: i32) -> (i32, i32, i32) {
    %c0_i32 = arith.constant 0 : i32
    %c0_i32_0 = arith.constant 0 : i32
    return %arg0, %c0_i32, %arg1 : i32, i32, i32
  }
}

</mosaic_0001>

<llo_original>
// kernel: tpu_custom_call.1
$region0: #{tpu_custom_call.1}
  #allocation0 [shape = 'u32[]', space=smem, size = 0x4, offset = 0x4, fixed_abs, tag = 'smem constant byte address 0x4 - core index']
  #allocation1 [shape = 'u32[144,128]{1,0:T(1,128)}', space=vmem, size = 0x12000, scoped, tag = 'internal scratch']
  %s0 = inlined_call_operand.hbm [shape: f32[2,8,256], index: 0, kind: input, shape index: {}]
  %s1 = inlined_call_operand.vmem [shape: f32[8,2], index: 1, kind: input, shape index: {}]
  %s2 = inlined_call_operand.vmem [shape: f32[2], index: 2, kind: input, shape index: {}]
  %s3 = inlined_call_operand.hbm [shape: f32[2,2,256], index: 3, kind: output, shape index: {}]
  %s4 = sld [smem:[#allocation0]]
  $region53: #{tpu_custom_call.1} parent=0
    _
  %s6 = ssub.s32 1, %s4
  %s7 = scalar_select 0, %s6, %s4
  $region1: #{tpu_custom_call.1} parent=0
    #allocation2 [shape = 'u8[16384]{0}', space=vmem, size = 0x4000, scoped, tag = 'input window, operand 0']
    #allocation3 [shape = 's32[2]{0}', space=sflag, size = 0x8, scoped, tag = 'scoped memory for tpu_custom_call.1']
    #allocation4 [shape = 's32[2]{0}', space=sflag, size = 0x8, scoped, tag = 'scoped memory for tpu_custom_call.1']
    #allocation5 [shape = 's32[2]{0}', space=sflag, size = 0x8, scoped, tag = 'scoped memory for tpu_custom_call.1']
    #allocation6 [shape = 'u8[512]{0}', space=smem, size = 0x200, scoped, tag = 'input window, operand 2, single buffered']
    #allocation7 [shape = 'u8[4096]{0}', space=vmem, size = 0x1000, scoped, tag = 'output window, operand 0']
    %8 = vsyncpa [#allocation3], 0
    %s9 = scalar_lea.sflag [#allocation3], 1
    %10 = vsyncpa %s9, 0
    %11 = vsyncpa [#allocation5], 0
    %12 = vsyncpa [#allocation4], 0
    %s13 = scalar_lea.sflag [#allocation4], 1
    %14 = vsyncpa %s13, 0
    loop: start=0, step=1, limit=4
    $region2: #{tpu_custom_call.1} parent=1 // loop_pre_header
      _
    $region3: #{tpu_custom_call.1} parent=1 // loop_header
      %s16 = sphi 0, %s20
      %p17 = scmp.ge.s32.totalorder %s16, 4
      %s23 = sphi 0, %s35
      %s24 = sphi 0, %s31
      %s25 = sphi 0, %s23
      %s26 = sphi 0, %s24
      %s27 = sphi 0, %s25
      %s28 = sphi 0, %s26
      %s40 = sphi 0, %s42
      %s43 = sphi 0, %s40
      %s44 = sphi 0, %s43
      %s60 = sphi 0, %s44
      %s64 = sphi 0, %s64
      %s66 = sphi 0, %s64
      %s67 = sphi 0, %s66
      %s81 = sphi 0, %s67
      %s85 = sphi 0, %s85
      %s87 = sphi 0, %s85
      %s88 = sphi 0, %s87
      %s102 = sphi 0, %s88
      %s110 = sphi 0, %s112
      %s113 = sphi 0, %s110
      %s114 = sphi 0, %s113
      %s130 = sphi 0, %s114
    $region4: #{tpu_custom_call.1} parent=1 // loop_header_branch
      %19 = sbr.rel (%p17) target = $region8
    $region5: #{tpu_custom_call.1} parent=1 // loop_body
      %s21 = ssub.s32 %s16, 1
      %s22 = ssub.s32 %s16, 2
      %s29 = sadd.s32 1, %s24
      %p30 = scmp.ge.s32.totalorder %s29, 1
      %s31 = scalar_select %p30, 0, %s29
      %s32 = sadd.s32 1, %s23
      %s33 = scalar_select %p30, %s32, %s23
      %p34 = scmp.ge.s32.totalorder %s33, 2
      %s35 = scalar_select %p34, 0, %s33
      %s36 = ssub.s32 %s23, %s35
      %s37 = ssub.s32 %s24, %s31
      %s38 = sor.u32 %s36, %s37
      %p39 = scmp.eq.s32.totalorder %s38, 0
      %s41 = sadd.s32 %s40, 1
      %s42 = scalar_select %p39, %s40, %s41
      %p45 = pneg %p39
      %p46 = scmp.eq.s32.totalorder %s16, 1
      %p47 = por %p45, %p46
      %p48 = scmp.ne.s32.totalorder %s40, %s43
      %p49 = scmp.eq.s32.totalorder %s16, 0
      %p50 = por %p48, %p49
      %p51 = scmp.ne.s32.totalorder %s40, %s43
      %p52 = scmp.eq.s32.totalorder %s21, 1
      %p53 = por %p51, %p52
      %p54 = scmp.ne.s32.totalorder %s43, %s44
      %p55 = scmp.eq.s32.totalorder %s21, 0
      %p56 = por %p54, %p55
      %p57 = scmp.ne.s32.totalorder %s43, %s44
      %p58 = scmp.eq.s32.totalorder %s22, 1
      %p59 = por %p57, %p58
      %p61 = scmp.ne.s32.totalorder %s44, %s60
      %p62 = scmp.eq.s32.totalorder %s22, 0
      %p63 = por %p61, %p62
      %s65 = sadd.s32 %s64, 1
      %p68 = scmp.eq.s32.totalorder %s16, 1
      %p69 = scmp.ne.s32.totalorder %s64, %s66
      %p70 = scmp.eq.s32.totalorder %s16, 0
      %p71 = por %p69, %p70
      %p72 = scmp.ne.s32.totalorder %s64, %s66
      %p73 = scmp.eq.s32.totalorder %s21, 1
      %p74 = por %p72, %p73
      %p75 = scmp.ne.s32.totalorder %s66, %s67
      %p76 = scmp.eq.s32.totalorder %s21, 0
      %p77 = por %p75, %p76
      %p78 = scmp.ne.s32.totalorder %s66, %s67
      %p79 = scmp.eq.s32.totalorder %s22, 1
      %p80 = por %p78, %p79
      %p82 = scmp.ne.s32.totalorder %s67, %s81
      %p83 = scmp.eq.s32.totalorder %s22, 0
      %p84 = por %p82, %p83
      %s86 = sadd.s32 %s85, 1
      %p89 = scmp.eq.s32.totalorder %s16, 1
      %p90 = scmp.ne.s32.totalorder %s85, %s87
      %p91 = scmp.eq.s32.totalorder %s16, 0
      %p92 = por %p90, %p91
      %p93 = scmp.ne.s32.totalorder %s85, %s87
      %p94 = scmp.eq.s32.totalorder %s21, 1
      %p95 = por %p93, %p94
      %p96 = scmp.ne.s32.totalorder %s87, %s88
      %p97 = scmp.eq.s32.totalorder %s21, 0
      %p98 = por %p96, %p97
      %p99 = scmp.ne.s32.totalorder %s87, %s88
      %p100 = scmp.eq.s32.totalorder %s22, 1
      %p101 = por %p99, %p100
      %p103 = scmp.ne.s32.totalorder %s88, %s102
      %p104 = scmp.eq.s32.totalorder %s22, 0
      %p105 = por %p103, %p104
      %s106 = ssub.s32 %s23, %s35
      %s107 = ssub.s32 %s24, %s31
      %s108 = sor.u32 %s106, %s107
      %p109 = scmp.eq.s32.totalorder %s108, 0
      %s111 = sadd.s32 %s110, 1
      %s112 = scalar_select %p109, %s110, %s111
      %p115 = pneg %p109
      %p116 = scmp.eq.s32.totalorder %s16, 1
      %p117 = por %p115, %p116
      %p118 = scmp.ne.s32.totalorder %s110, %s113
      %p119 = scmp.eq.s32.totalorder %s16, 0
      %p120 = por %p118, %p119
      %p121 = scmp.ne.s32.totalorder %s110, %s113
      %p122 = scmp.eq.s32.totalorder %s21, 1
      %p123 = por %p121, %p122
      %p124 = scmp.ne.s32.totalorder %s113, %s114
      %p125 = scmp.eq.s32.totalorder %s21, 0
      %p126 = por %p124, %p125
      %p127 = scmp.ne.s32.totalorder %s113, %s114
      %p128 = scmp.eq.s32.totalorder %s22, 1
      %p129 = por %p127, %p128
      %p131 = scmp.ne.s32.totalorder %s114, %s130
      %p132 = scmp.eq.s32.totalorder %s22, 0
      %p133 = por %p131, %p132
      %p134 = scmp.le.s32.totalorder 1, %s16
      %p135 = scmp.lt.s32.totalorder %s16, 3
      %p136 = pnand %p134, %p135
      %p137 = pneg %p136
      // Predicated region
      $region9: #{tpu_custom_call.1} parent=5 // pred_check
        _
      $region10: #{tpu_custom_call.1} parent=5 // pred_check_branch
        %139 = sbr.rel (%p136) target = $region12
      $region11: #{tpu_custom_call.1} parent=5 // pred_region
        %s140 = ssub.s32 %s16, 1
        // Predicated region
        $region13: #{tpu_custom_call.1} parent=11 // pred_check
          %p141 = pneg %p77
        $region14: #{tpu_custom_call.1} parent=11 // pred_check_branch
          %143 = sbr.rel (%p141) target = $region16
        $region15: #{tpu_custom_call.1} parent=11 // pred_region
          _
        $region16: #{tpu_custom_call.1} parent=11 // pred_fallthru
          _
        // Predicated region
        $region17: #{tpu_custom_call.1} parent=11 // pred_check
          %p144 = pneg %p98
        $region18: #{tpu_custom_call.1} parent=11 // pred_check_branch
          %146 = sbr.rel (%p144) target = $region20
        $region19: #{tpu_custom_call.1} parent=11 // pred_region
          %s148 = ssub.s32 16, 16
          %149 = vsyncadd [#allocation5], %s148
          %s151 = sshll.u32 %s2, 4
          %s152 = int_to_ptr.vmem [resolvable:$true] %s151
          %154 = dma.vmem_to_smem %s152, 16, [#allocation6], [#allocation5]
        $region20: #{tpu_custom_call.1} parent=11 // pred_fallthru
          _
      $region12: #{tpu_custom_call.1} parent=5 // pred_fallthru
        _
      %p155 = scmp.lt.s32.totalorder %s16, 2
      // Predicated region
      $region21: #{tpu_custom_call.1} parent=5 // pred_check
        %p156 = pneg %p155
      $region22: #{tpu_custom_call.1} parent=5 // pred_check_branch
        %158 = sbr.rel (%p156) target = $region24
      $region23: #{tpu_custom_call.1} parent=5 // pred_region
        // Predicated region
        $region25: #{tpu_custom_call.1} parent=23 // pred_check
          %p159 = pneg %p50
        $region26: #{tpu_custom_call.1} parent=23 // pred_check_branch
          %161 = sbr.rel (%p159) target = $region28
        $region27: #{tpu_custom_call.1} parent=23 // pred_region
          %s162 = sand.u32 %s40, 1
          %s163 = scalar_lea.sflag [#allocation3], %s162
          %s164 = sand.u32 %s40, 1
          %s165 = smul.addr %s164, 16
          %s166 = scalar_lea.vmem [#allocation2], %s165
          %s167 = smul.u32 2, %s24
          %s169 = ssub.s32 256, 256
          %170 = vsyncadd %s163, %s169
          %s171 = smul.addr %s23, 2
          %s172 = sadd.s32 %s167, %s171
          %s173 = smul.addr %s172, 128
          %s174 = scalar_lea.hbm %s0, %s173
          %s176 = sshll.u32 %s166, 4
          %s177 = int_to_ptr.vmem [resolvable:$true] %s176
          %179 = dma.hbm_to_vmem [thread:$0]  %s174, 256, %s177, %s163
        $region28: #{tpu_custom_call.1} parent=23 // pred_fallthru
          _
      $region24: #{tpu_custom_call.1} parent=5 // pred_fallthru
        _
      %p180 = scmp.le.s32.totalorder 1, %s16
      %p181 = scmp.lt.s32.totalorder %s16, 3
      %p182 = pnand %p180, %p181
      %p183 = pneg %p182
      // Predicated region
      $region29: #{tpu_custom_call.1} parent=5 // pred_check
        _
      $region30: #{tpu_custom_call.1} parent=5 // pred_check_branch
        %185 = sbr.rel (%p182) target = $region32
      $region31: #{tpu_custom_call.1} parent=5 // pred_region
        %s186 = ssub.s32 %s16, 1
        %s187 = sand.u32 %s43, 1
        %s188 = scalar_lea.sflag [#allocation3], %s187
        %s189 = sand.u32 %s43, 1
        %s190 = smul.addr %s189, 16
        %s191 = scalar_lea.vmem [#allocation2], %s190
        // Predicated region
        $region33: #{tpu_custom_call.1} parent=31 // pred_check
          %p192 = pneg %p56
        $region34: #{tpu_custom_call.1} parent=31 // pred_check_branch
          %194 = sbr.rel (%p192) target = $region36
        $region35: #{tpu_custom_call.1} parent=31 // pred_region
          %195 = dma.done %s188, 256
        $region36: #{tpu_custom_call.1} parent=31 // pred_fallthru
          _
        // Predicated region
        $region37: #{tpu_custom_call.1} parent=31 // pred_check
          %p196 = pneg %p98
        $region38: #{tpu_custom_call.1} parent=31 // pred_check_branch
          %198 = sbr.rel (%p196) target = $region40
        $region39: #{tpu_custom_call.1} parent=31 // pred_region
          %199 = dma.done [#allocation5], 16
        $region40: #{tpu_custom_call.1} parent=31 // pred_fallthru
          _
        %200 = sfence
        %s201 = sand.u32 %s43, 1
        %s202 = scalar_lea.sflag [#allocation3], %s201
        %s203 = sand.u32 %s43, 1
        %s204 = smul.addr %s203, 16
        %s205 = scalar_lea.vmem [#allocation2], %s204
        %p206 = pneg %p56
        %p207 = pneg %p53
        %p208 = pneg %p77
        %p209 = pneg %p74
        %p210 = pneg %p98
        %p211 = pneg %p95
        %p212 = pneg %p126
        %p213 = pneg %p123
        %s214 = sand.u32 %s113, 1
        %s215 = scalar_lea.sflag [#allocation4], %s214
        %s216 = sand.u32 %s113, 1
        %s217 = smul.addr %s216, 4
        %s218 = scalar_lea.vmem [#allocation7], %s217
        %s219 = smul.u32 2, %s26
        %s220 = smul.u32 2, %s26
        %v221 = vld [vmem:[%s191] sm:$0xff]
        %v222 = vld [vmem:[%s191 + $0x8] sm:$0xff]
        %v223 = vld [vmem:[%s1] sm:$0xff]
        %225 = vset.pattern.permute.xlu0 0
        %226 = vperm.xlu0 %225, %v223
        %v227 = vpop.permute.xlu0 %226
        %v229 = vmul.f32 %v221, %v227
        %v230 = vmul.f32 %v222, %v227
        %v231 = vrot.slane %v229, 4
        %v232 = vadd.f32 %v229, %v231
        %v233 = vrot.slane %v232, 2
        %v234 = vadd.f32 %v232, %v233
        %v235 = vrot.slane %v234, 1
        %v236 = vadd.f32 %v234, %v235
        %v237 = vrot.slane %v230, 4
        %v238 = vadd.f32 %v230, %v237
        %v239 = vrot.slane %v238, 2
        %v240 = vadd.f32 %v238, %v239
        %v241 = vrot.slane %v240, 1
        %v242 = vadd.f32 %v240, %v241
        %s243 = sld [smem:[#allocation6]]
        %v244 = vstv %s243
        %v245 = vadd.f32 %v236, %v244
        %v246 = vadd.f32 %v242, %v244
        %247 = vset.pattern.permute.xlu0 1
        %248 = vperm.xlu0 %247, %v223
        %v249 = vpop.permute.xlu0 %248
        %v251 = vmul.f32 %v221, %v249
        %v252 = vmul.f32 %v222, %v249
        %v253 = vrot.slane %v251, 4
        %v254 = vadd.f32 %v251, %v253
        %v255 = vrot.slane %v254, 2
        %v256 = vadd.f32 %v254, %v255
        %v257 = vrot.slane %v256, 1
        %v258 = vadd.f32 %v256, %v257
        %v259 = vrot.slane %v252, 4
        %v260 = vadd.f32 %v252, %v259
        %v261 = vrot.slane %v260, 2
        %v262 = vadd.f32 %v260, %v261
        %v263 = vrot.slane %v262, 1
        %v264 = vadd.f32 %v262, %v263
        %s265 = sld [smem:[#allocation6 + $0x1]]
        %v266 = vstv %s265
        %v267 = vadd.f32 %v258, %v266
        %v268 = vadd.f32 %v264, %v266
        %v269 = vmul.f32 %v245, %v245
        %v270 = vmul.f32 %v246, %v246
        %v271 = vmul.f32 %v267, %v267
        %v272 = vmul.f32 %v268, %v268
        %v273 = vadd.f32 %v269, %v271
        %v274 = vadd.f32 %v270, %v272
        %vm275 = vcmp.gt.f32.partialorder %v273, 0.0
        %vm276 = vcmp.gt.f32.partialorder %v274, 0.0
        %v277 = vrsqrt.pop %v273
        %v278 = vmul.f32 %v273, %v277
        %vm279 = vcmp.eq.f32.partialorder %v273, inf
        %v280 = vsel %vm279, %v273, %v278
        %vm281 = vcmp.eq.f32.partialorder %v273, 0.0
        %v282 = vand.u32 %v273, 2147483648
        %v283 = vsel %vm281, %v282, %v280
        %v284 = vrsqrt.pop %v274
        %v285 = vmul.f32 %v274, %v284
        %vm286 = vcmp.eq.f32.partialorder %v274, inf
        %v287 = vsel %vm286, %v274, %v285
        %vm288 = vcmp.eq.f32.partialorder %v274, 0.0
        %v289 = vand.u32 %v274, 2147483648
        %v290 = vsel %vm288, %v289, %v287
        %v291 = vrcp.pop %v283
        %v292 = vmul.f32 1.0, %v291
        %v293 = vrcp.pop %v290
        %v294 = vmul.f32 1.0, %v293
        %v295 = vsel %vm275, %v292, 0.0
        %v296 = vsel %vm276, %v294, 0.0
        %v297 = vmul.f32 %v245, %v295
        %v298 = vmul.f32 %v246, %v296
        %v299 = vsel %vm275, %v297, 1.0
        %v300 = vsel %vm276, %v298, 1.0
        %v301 = vmul.f32 %v267, %v295
        %v302 = vmul.f32 %v268, %v296
        %vm303 = vcmask 1040384
        %v304 = vsel %vm303, %v299, %v301
        %v305 = vsel %vm303, %v300, %v302
        %v308 = vcombine.low %v304, %v305
        %v310 = vunpack.c.l.s4 1983009808
        %v311 = vunpack.c.0.s8 %v310
        %v312 = vlaneseq
        %v313 = vshrl.u32 %v312, 7
        %v314 = vsub.s32 %v311, %v313
        %v315 = vrot.slane %v308, %v314
        %317 = vst [vmem:[%s218] sm:$0xf] %v315
        %s318 = sand.u32 %s113, 1
        %s319 = scalar_lea.sflag [#allocation4], %s318
        %s320 = sand.u32 %s113, 1
        %s321 = smul.addr %s320, 4
        %s322 = scalar_lea.vmem [#allocation7], %s321
        // Predicated region
        $region41: #{tpu_custom_call.1} parent=31 // pred_check
          %p323 = pneg %p123
        $region42: #{tpu_custom_call.1} parent=31 // pred_check_branch
          %325 = sbr.rel (%p323) target = $region44
        $region43: #{tpu_custom_call.1} parent=31 // pred_region
          %s326 = smul.u32 2, %s26
          %s328 = ssub.s32 64, 64
          %329 = vsyncadd %s319, %s328
          %s330 = smul.addr %s25, 2
          %s331 = sadd.s32 %s326, %s330
          %s332 = smul.addr %s331, 32
          %s333 = scalar_lea.hbm %s3, %s332
          %s335 = sshll.u32 %s322, 4
          %s336 = int_to_ptr.vmem [resolvable:$true] %s335
          %338 = dma.vmem_to_hbm [thread:$0]  %s336, 64, %s333, %s319
        $region44: #{tpu_custom_call.1} parent=31 // pred_fallthru
          _
      $region32: #{tpu_custom_call.1} parent=5 // pred_fallthru
        _
      %p339 = scmp.le.s32.totalorder 2, %s16
      // Predicated region
      $region45: #{tpu_custom_call.1} parent=5 // pred_check
        %p340 = pneg %p339
      $region46: #{tpu_custom_call.1} parent=5 // pred_check_branch
        %342 = sbr.rel (%p340) target = $region48
      $region47: #{tpu_custom_call.1} parent=5 // pred_region
        %s343 = ssub.s32 %s16, 2
        // Predicated region
        $region49: #{tpu_custom_call.1} parent=47 // pred_check
          %p344 = pneg %p129
        $region50: #{tpu_custom_call.1} parent=47 // pred_check_branch
          %346 = sbr.rel (%p344) target = $region52
        $region51: #{tpu_custom_call.1} parent=47 // pred_region
          %s347 = sand.u32 %s114, 1
          %s348 = scalar_lea.sflag [#allocation4], %s347
          %s349 = sand.u32 %s114, 1
          %s350 = smul.addr %s349, 4
          %s351 = scalar_lea.vmem [#allocation7], %s350
          %352 = dma.done %s348, 64
        $region52: #{tpu_custom_call.1} parent=47 // pred_fallthru
          _
      $region48: #{tpu_custom_call.1} parent=5 // pred_fallthru
        _
    $region6: #{tpu_custom_call.1} parent=1 // loop_footer
      %s20 = sadd.s32 1, %s16
    $region7: #{tpu_custom_call.1} parent=1 // loop_footer_branch
      %15 = sbr.rel target = $region3
    $region8: #{tpu_custom_call.1} parent=1 // loop_exit
      _
    %353 = vsyncpa [#allocation3], 1
    %s354 = scalar_lea.sflag [#allocation3], 1
    %355 = vsyncpa %s354, 1
    %356 = vsyncpa [#allocation4], 1
    %s357 = scalar_lea.sflag [#allocation4], 1
    %358 = vsyncpa %s357, 1
    %359 = vsyncpa [#allocation5], 1
    %s360 = scalar_lea.sflag [#allocation5], 1
    %361 = vsyncpa %s360, 1

</llo_original>
